<compile_context>
chip_gen: v7x
topology: tpu7x:2x2x1
jax: 0.10.0
libtpu: 0.0.40
codegen_flags: <defaults>
</compile_context>

<pallas_src>
import functools

import jax
import jax.numpy as jnp
from jax.experimental import pallas as pl
from jax.experimental.pallas import tpu as pltpu

BN_EPS = 1e-5
LANE = 128
_VMEM_HEADROOM = 8 * 1024 * 1024          # leave room for compiler scratch / neighbors
_DEFAULT_VMEM_CAP = 64 * 1024 * 1024      # conservative fallback (v7x per-TC VMEM)


def _round_up(n, m):
    return (n + m - 1) // m * m


def _pad2(m, rows, cols):
    return jnp.pad(m, ((0, rows - m.shape[0]), (0, cols - m.shape[1])))


def _vmem_capacity_bytes():
    try:
        return int(pltpu.get_tpu_info().vmem_capacity_bytes)
    except Exception:
        return _DEFAULT_VMEM_CAP


def _ffn_kernel(x_ref,                     # VMEM: [N, in_k]  (matmul dtype)
                w1_ref, w2_ref, w3_ref,    # VMEM: padded weights (matmul dtype)
                aux_ref,                   # VMEM: (8, P) rows = g1, be1, g2, be2, b3, [a,0..]
                o_ref,                     # VMEM: [N, out_p] f32
                *, matmul_dtype):
    hid_p = w1_ref.shape[1]
    out_p = w3_ref.shape[1]

    aux = aux_ref[...]
    g1, be1 = aux[0:1, :hid_p], aux[1:2, :hid_p]
    g2, be2 = aux[2:3, :hid_p], aux[3:4, :hid_p]
    b3 = aux[4:5, :out_p]
    a = aux[5:6, 0:1]                      # PReLU slope, broadcast from (1,1)

    inv_n = 1.0 / x_ref.shape[0]

    def bn_prelu(h, gamma, beta):
        # Single-pass batch statistics: the two column reductions are independent
        # (no dependent "center then square" second pass); biased variance.
        s1 = jnp.sum(h, axis=0, keepdims=True)
        s2 = jnp.sum(h * h, axis=0, keepdims=True)
        mean = s1 * inv_n
        var = jnp.maximum(s2 * inv_n - mean * mean, 0.0)
        scale = gamma * jax.lax.rsqrt(var + BN_EPS)        # rsqrt -> EUP
        shift = beta - mean * scale
        hn = h * scale + shift
        # PReLU as one select (Dropout(p=0.0) == identity).
        return jnp.where(hn >= 0, hn, a * hn)

    def mm(lhs, w_ref):
        return jnp.dot(lhs.astype(matmul_dtype), w_ref[...],
                       preferred_element_type=jnp.float32)

    # Layers 1/2: Linear bias omitted — exactly cancelled by BN mean subtraction.
    h = bn_prelu(mm(x_ref[...], w1_ref), g1, be1)
    h = bn_prelu(mm(h, w2_ref), g2, be2)
    o_ref[...] = (mm(h, w3_ref) + b3).astype(o_ref.dtype)


def prepare_params(params, matmul_dtype=jnp.bfloat16):
    """One-time prep: pad/cast weights, pack small per-layer vectors into one tile."""
    (w1, b1, g1, be1, w2, b2, g2, be2, w3, b3, prelu_a) = params
    del b1, b2                              # cancelled exactly by BN mean subtraction

    in_feats, hidden = w1.shape
    out_feats = w3.shape[1]
    mdt = jnp.dtype(matmul_dtype)

    sub = 16 if mdt == jnp.dtype(jnp.bfloat16) else 8
    in_k = _round_up(in_feats, sub)         # contraction dim: sublane-aligned only
    hid_p = _round_up(hidden, LANE)         # lane-dense hidden / output dims
    out_p = _round_up(out_feats, LANE)
    p = max(hid_p, out_p)

    w1p = _pad2(w1, in_k, hid_p).astype(mdt)
    w2p = _pad2(w2, hid_p, hid_p).astype(mdt)
    w3p = _pad2(w3, hid_p, out_p).astype(mdt)

    aux = jnp.zeros((8, p), jnp.float32)
    aux = aux.at[0, :hidden].set(g1[0])
    aux = aux.at[1, :hidden].set(be1[0])
    aux = aux.at[2, :hidden].set(g2[0])
    aux = aux.at[3, :hidden].set(be2[0])
    aux = aux.at[4, :out_feats].set(b3[0])
    aux = aux.at[5, 0].set(prelu_a[0])

    return dict(w1=w1p, w2=w2p, w3=w3p, aux=aux,
                in_feats=in_feats, in_k=in_k,
                hid_p=hid_p, out_p=out_p, out_feats=out_feats,
                matmul_dtype=mdt)


def feedforward_net(x, prep):
    """Fused forward pass. x: [N, in_feats] f32, prep from prepare_params()."""
    n, in_feats = x.shape
    assert in_feats == prep["in_feats"]
    mdt = prep["matmul_dtype"]
    in_k, hid_p, out_p = prep["in_k"], prep["hid_p"], prep["out_p"]

    # Wrapper-side cast + tiny K-dim pad: halves the dominant x DMA on the bf16 path.
    xp = _pad2(x, n, in_k).astype(mdt)

    # VMEM budget against the actual chip generation (no blanket 2x factor —
    # grid-of-1 kernel has no double buffering).
    elt = mdt.itemsize
    est = (n * in_k * elt
           + 2 * n * hid_p * (4 + elt)                       # hidden acts f32 + cast copy
           + n * out_p * 4
           + elt * (in_k * hid_p + hid_p * hid_p + hid_p * out_p)
           + 4 * 8 * max(hid_p, out_p))
    est = est * 5 // 4                                       # compiler-temporary margin
    usable = _vmem_capacity_bytes() - _VMEM_HEADROOM
    if est > usable:
        raise ValueError(
            f"batch of {n} rows does not fit the single-block fused kernel "
            f"(~{est >> 20} MiB VMEM needed, usable {usable >> 20} MiB); "
            "needs the gridded two-pass BatchNorm variant for this size.")
    # Only raise the scoped-VMEM limit when the estimate actually needs it.
    vmem_limit = int(min(usable, est)) if est > 12 * 1024 * 1024 else None

    vmem = pl.BlockSpec(memory_space=pltpu.MemorySpace.VMEM)
    out_padded = pl.pallas_call(
        functools.partial(_ffn_kernel, matmul_dtype=mdt),
        out_shape=jax.ShapeDtypeStruct((n, out_p), jnp.float32),
        in_specs=[vmem] * 5,
        out_specs=vmem,
        compiler_params=pltpu.CompilerParams(vmem_limit_bytes=vmem_limit),
    )(xp, prep["w1"], prep["w2"], prep["w3"], prep["aux"])

    return out_padded[:, :prep["out_feats"]]


def init_params(key, in_feats, hidden, out_feats):
    """Deterministic init mirroring reset_parameters():
       xavier_uniform(gain=sqrt(2)) weights, zero biases, BN gamma=1/beta=0, PReLU a=0.25."""
    gain = jnp.sqrt(2.0)

    def xavier(key, fan_in, fan_out):
        bound = gain * jnp.sqrt(6.0 / (fan_in + fan_out))
        # stored as [fan_in, fan_out] (already transposed for x @ W)
        return jax.random.uniform(key, (fan_in, fan_out), jnp.float32, -bound, bound)

    k1, k2, k3 = jax.random.split(key, 3)
    w1 = xavier(k1, in_feats, hidden)
    w2 = xavier(k2, hidden, hidden)
    w3 = xavier(k3, hidden, out_feats)
    b1 = jnp.zeros((1, hidden), jnp.float32)
    b2 = jnp.zeros((1, hidden), jnp.float32)
    b3 = jnp.zeros((1, out_feats), jnp.float32)
    g1 = jnp.ones((1, hidden), jnp.float32)
    g2 = jnp.ones((1, hidden), jnp.float32)
    be1 = jnp.zeros((1, hidden), jnp.float32)
    be2 = jnp.zeros((1, hidden), jnp.float32)
    prelu_a = jnp.full((1,), 0.25, jnp.float32)
    return (w1, b1, g1, be1, w2, b2, g2, be2, w3, b3, prelu_a)


def reference_forward(x, params):
    """Pure-JAX reference matching the PyTorch module (training-mode BN)."""
    (w1, b1, g1, be1, w2, b2, g2, be2, w3, b3, prelu_a) = params
    a = prelu_a[0]

    def bn_prelu(h, gamma, beta):
        mean = jnp.mean(h, axis=0, keepdims=True)
        var = jnp.mean((h - mean) ** 2, axis=0, keepdims=True)
        hn = (h - mean) / jnp.sqrt(var + BN_EPS) * gamma + beta
        return jnp.where(hn >= 0, hn, a * hn)

    h = bn_prelu(x @ w1 + b1, g1, be1)
    h = bn_prelu(h @ w2 + b2, g2, be2)
    return h @ w3 + b3


if __name__ == "__main__":
    # FeedForwardNet(in_feats=32, hidden=64, out_feats=16, n_layers=3, dropout=0.0, bns=True)
    N, IN_FEATS, HIDDEN, OUT_FEATS = 16, 32, 64, 16

    key = jax.random.PRNGKey(0)
    kx, kp = jax.random.split(key)
    x = jax.random.normal(kx, (N, IN_FEATS), jnp.float32)
    params = init_params(kp, IN_FEATS, HIDDEN, OUT_FEATS)

    ref = reference_forward(x, params)

    # Primary path: bf16 MXU operands (native on v5e/v6e/v7x), f32 accumulation,
    # f32 BN/PReLU elementwise.
    prep_bf16 = prepare_params(params, matmul_dtype=jnp.bfloat16)
    out_bf16 = jax.block_until_ready(feedforward_net(x, prep_bf16))
    assert out_bf16.shape == (N, OUT_FEATS)
    assert bool(jnp.all(jnp.isfinite(out_bf16)))
    assert jnp.allclose(out_bf16, ref, atol=2e-1, rtol=1e-1)  # loose tol for bf16 operands

    # f32 operand path: matches the torch module's math closely.
    prep_f32 = prepare_params(params, matmul_dtype=jnp.float32)
    out_f32 = jax.block_until_ready(feedforward_net(x, prep_f32))
    assert jnp.allclose(out_f32, ref, atol=1e-4, rtol=1e-4)

    print("KERNEL_OK")
</pallas_src>

<mosaic_0001>
module attributes {stable_mosaic.version = 11 : i64} {
  func.func @_ffn_kernel(%arg0: memref<16x32xbf16, #tpu.memory_space<vmem>>, %arg1: memref<32x128xbf16, #tpu.memory_space<vmem>>, %arg2: memref<128x128xbf16, #tpu.memory_space<vmem>>, %arg3: memref<128x128xbf16, #tpu.memory_space<vmem>>, %arg4: memref<8x128xf32, #tpu.memory_space<vmem>>, %arg5: memref<16x128xf32, #tpu.memory_space<vmem>>) attributes {dimension_semantics = [], scalar_prefetch = 0 : i64, scratch_operands = 0 : i64, tpu.core_type = #tpu.core_type<tc>} {
    %c0 = arith.constant 0 : index
    %c0_0 = arith.constant 0 : index
    %0 = vector.load %arg4[%c0, %c0_0] : memref<8x128xf32, #tpu.memory_space<vmem>>, vector<8x128xf32>
    %1 = vector.extract_strided_slice %0 {offsets = [0, 0], sizes = [1, 128], strides = [1, 1]} : vector<8x128xf32> to vector<1x128xf32>
    %2 = vector.extract_strided_slice %0 {offsets = [1, 0], sizes = [1, 128], strides = [1, 1]} : vector<8x128xf32> to vector<1x128xf32>
    %3 = vector.extract_strided_slice %0 {offsets = [2, 0], sizes = [1, 128], strides = [1, 1]} : vector<8x128xf32> to vector<1x128xf32>
    %4 = vector.extract_strided_slice %0 {offsets = [3, 0], sizes = [1, 128], strides = [1, 1]} : vector<8x128xf32> to vector<1x128xf32>
    %5 = vector.extract_strided_slice %0 {offsets = [4, 0], sizes = [1, 128], strides = [1, 1]} : vector<8x128xf32> to vector<1x128xf32>
    %6 = vector.extract_strided_slice %0 {offsets = [5, 0], sizes = [1, 1], strides = [1, 1]} : vector<8x128xf32> to vector<1x1xf32>
    %c0_1 = arith.constant 0 : index
    %c0_2 = arith.constant 0 : index
    %7 = vector.load %arg0[%c0_1, %c0_2] : memref<16x32xbf16, #tpu.memory_space<vmem>>, vector<16x32xbf16>
    %c0_3 = arith.constant 0 : index
    %c0_4 = arith.constant 0 : index
    %8 = vector.load %arg1[%c0_3, %c0_4] : memref<32x128xbf16, #tpu.memory_space<vmem>>, vector<32x128xbf16>
    %cst = arith.constant dense<0.000000e+00> : vector<16x128xf32>
    %9 = tpu.matmul %7, %8, %cst {dimension_numbers = #tpu.dot_dimension_numbers<[1], [0], [0], [1], [0, 0, 1, 1], [], []>} : vector<16x32xbf16>, vector<32x128xbf16>, vector<16x128xf32> -> vector<16x128xf32>
    %cst_5 = arith.constant dense<0.000000e+00> : vector<128xf32>
    %10 = vector.multi_reduction <add>, %9, %cst_5 [0] : vector<16x128xf32> to vector<128xf32>
    %11 = vector.shape_cast %10 : vector<128xf32> to vector<1x128xf32>
    %12 = arith.mulf %9, %9 : vector<16x128xf32>
    %cst_6 = arith.constant dense<0.000000e+00> : vector<128xf32>
    %13 = vector.multi_reduction <add>, %12, %cst_6 [0] : vector<16x128xf32> to vector<128xf32>
    %14 = vector.shape_cast %13 : vector<128xf32> to vector<1x128xf32>
    %cst_7 = arith.constant 6.250000e-02 : f32
    %15 = vector.broadcast %cst_7 : f32 to vector<1x128xf32>
    %16 = arith.mulf %11, %15 : vector<1x128xf32>
    %cst_8 = arith.constant 6.250000e-02 : f32
    %17 = vector.broadcast %cst_8 : f32 to vector<1x128xf32>
    %18 = arith.mulf %14, %17 : vector<1x128xf32>
    %19 = arith.mulf %16, %16 : vector<1x128xf32>
    %20 = arith.subf %18, %19 : vector<1x128xf32>
    %cst_9 = arith.constant 0.000000e+00 : f32
    %21 = vector.broadcast %cst_9 : f32 to vector<1x128xf32>
    %22 = arith.maximumf %20, %21 : vector<1x128xf32>
    %cst_10 = arith.constant 9.99999974E-6 : f32
    %23 = vector.broadcast %cst_10 : f32 to vector<1x128xf32>
    %24 = arith.addf %22, %23 : vector<1x128xf32>
    %25 = math.rsqrt %24 : vector<1x128xf32>
    %26 = arith.mulf %1, %25 : vector<1x128xf32>
    %27 = arith.mulf %16, %26 : vector<1x128xf32>
    %28 = arith.subf %2, %27 : vector<1x128xf32>
    %29 = vector.broadcast %26 : vector<1x128xf32> to vector<16x128xf32>
    %30 = arith.mulf %9, %29 : vector<16x128xf32>
    %31 = vector.broadcast %28 : vector<1x128xf32> to vector<16x128xf32>
    %32 = arith.addf %30, %31 : vector<16x128xf32>
    %cst_11 = arith.constant 0.000000e+00 : f32
    %33 = vector.broadcast %cst_11 : f32 to vector<16x128xf32>
    %34 = arith.cmpf oge, %32, %33 : vector<16x128xf32>
    %35 = vector.broadcast %6 : vector<1x1xf32> to vector<16x128xf32>
    %36 = arith.mulf %35, %32 : vector<16x128xf32>
    %37 = arith.select %34, %32, %36 : vector<16x128xi1>, vector<16x128xf32>
    %38 = arith.truncf %37 : vector<16x128xf32> to vector<16x128xbf16>
    %c0_12 = arith.constant 0 : index
    %c0_13 = arith.constant 0 : index
    %39 = vector.load %arg2[%c0_12, %c0_13] : memref<128x128xbf16, #tpu.memory_space<vmem>>, vector<128x128xbf16>
    %cst_14 = arith.constant dense<0.000000e+00> : vector<16x128xf32>
    %40 = tpu.matmul %38, %39, %cst_14 {dimension_numbers = #tpu.dot_dimension_numbers<[1], [0], [0], [1], [0, 0, 1, 1], [], []>} : vector<16x128xbf16>, vector<128x128xbf16>, vector<16x128xf32> -> vector<16x128xf32>
    %cst_15 = arith.constant dense<0.000000e+00> : vector<128xf32>
    %41 = vector.multi_reduction <add>, %40, %cst_15 [0] : vector<16x128xf32> to vector<128xf32>
    %42 = vector.shape_cast %41 : vector<128xf32> to vector<1x128xf32>
    %43 = arith.mulf %40, %40 : vector<16x128xf32>
    %cst_16 = arith.constant dense<0.000000e+00> : vector<128xf32>
    %44 = vector.multi_reduction <add>, %43, %cst_16 [0] : vector<16x128xf32> to vector<128xf32>
    %45 = vector.shape_cast %44 : vector<128xf32> to vector<1x128xf32>
    %cst_17 = arith.constant 6.250000e-02 : f32
    %46 = vector.broadcast %cst_17 : f32 to vector<1x128xf32>
    %47 = arith.mulf %42, %46 : vector<1x128xf32>
    %cst_18 = arith.constant 6.250000e-02 : f32
    %48 = vector.broadcast %cst_18 : f32 to vector<1x128xf32>
    %49 = arith.mulf %45, %48 : vector<1x128xf32>
    %50 = arith.mulf %47, %47 : vector<1x128xf32>
    %51 = arith.subf %49, %50 : vector<1x128xf32>
    %cst_19 = arith.constant 0.000000e+00 : f32
    %52 = vector.broadcast %cst_19 : f32 to vector<1x128xf32>
    %53 = arith.maximumf %51, %52 : vector<1x128xf32>
    %cst_20 = arith.constant 9.99999974E-6 : f32
    %54 = vector.broadcast %cst_20 : f32 to vector<1x128xf32>
    %55 = arith.addf %53, %54 : vector<1x128xf32>
    %56 = math.rsqrt %55 : vector<1x128xf32>
    %57 = arith.mulf %3, %56 : vector<1x128xf32>
    %58 = arith.mulf %47, %57 : vector<1x128xf32>
    %59 = arith.subf %4, %58 : vector<1x128xf32>
    %60 = vector.broadcast %57 : vector<1x128xf32> to vector<16x128xf32>
    %61 = arith.mulf %40, %60 : vector<16x128xf32>
    %62 = vector.broadcast %59 : vector<1x128xf32> to vector<16x128xf32>
    %63 = arith.addf %61, %62 : vector<16x128xf32>
    %cst_21 = arith.constant 0.000000e+00 : f32
    %64 = vector.broadcast %cst_21 : f32 to vector<16x128xf32>
    %65 = arith.cmpf oge, %63, %64 : vector<16x128xf32>
    %66 = vector.broadcast %6 : vector<1x1xf32> to vector<16x128xf32>
    %67 = arith.mulf %66, %63 : vector<16x128xf32>
    %68 = arith.select %65, %63, %67 : vector<16x128xi1>, vector<16x128xf32>
    %69 = arith.truncf %68 : vector<16x128xf32> to vector<16x128xbf16>
    %c0_22 = arith.constant 0 : index
    %c0_23 = arith.constant 0 : index
    %70 = vector.load %arg3[%c0_22, %c0_23] : memref<128x128xbf16, #tpu.memory_space<vmem>>, vector<128x128xbf16>
    %cst_24 = arith.constant dense<0.000000e+00> : vector<16x128xf32>
    %71 = tpu.matmul %69, %70, %cst_24 {dimension_numbers = #tpu.dot_dimension_numbers<[1], [0], [0], [1], [0, 0, 1, 1], [], []>} : vector<16x128xbf16>, vector<128x128xbf16>, vector<16x128xf32> -> vector<16x128xf32>
    %72 = vector.broadcast %5 : vector<1x128xf32> to vector<16x128xf32>
    %73 = arith.addf %71, %72 : vector<16x128xf32>
    %c0_25 = arith.constant 0 : index
    %c0_26 = arith.constant 0 : index
    %74 = vector.load %arg5[%c0_25, %c0_26] : memref<16x128xf32, #tpu.memory_space<vmem>>, vector<16x128xf32>
    tpu.vector_store %arg5[%c0_25, %c0_26], %73 {strides = array<i32>} : memref<16x128xf32, #tpu.memory_space<vmem>>, vector<16x128xf32>,
    return
  }
}

</mosaic_0001>

<llo_original>
// kernel: tpu_custom_call.1
$region0: #{tpu_custom_call.1}
  #allocation0 [shape = 'u32[]', space=smem, size = 0x4, offset = 0x4, fixed_abs, tag = 'smem constant byte address 0x4 - core index']
  #allocation1 [shape = 'u32[144,128]{1,0:T(1,128)}', space=vmem, size = 0x12000, scoped, tag = 'internal scratch']
  %s0 = inlined_call_operand.hbm [shape: bf16[16,32], index: 0, kind: input, shape index: {}]
  %s1 = inlined_call_operand.hbm [shape: bf16[32,128], index: 1, kind: input, shape index: {}]
  %s2 = inlined_call_operand.hbm [shape: bf16[128,128], index: 2, kind: input, shape index: {}]
  %s3 = inlined_call_operand.hbm [shape: bf16[128,128], index: 3, kind: input, shape index: {}]
  %s4 = inlined_call_operand.vmem [shape: f32[8,128], index: 4, kind: input, shape index: {}]
  %s5 = inlined_call_operand.hbm [shape: f32[16,128], index: 5, kind: output, shape index: {}]
  %s6 = sld [smem:[#allocation0]]
  $region46: #{tpu_custom_call.1} parent=0
    _
  %s8 = ssub.s32 1, %s6
  %s9 = scalar_select 0, %s8, %s6
  $region1: #{tpu_custom_call.1} parent=0
    #allocation2 [shape = 'u8[4096]{0}', space=vmem, size = 0x1000, scoped, tag = 'input window, operand 0, single buffered']
    #allocation3 [shape = 's32[1]{0}', space=sflag, size = 0x4, scoped, tag = 'scoped memory for tpu_custom_call.1']
    #allocation4 [shape = 's32[1]{0}', space=sflag, size = 0x4, scoped, tag = 'scoped memory for tpu_custom_call.1']
    #allocation5 [shape = 'u8[8192]{0}', space=vmem, size = 0x2000, scoped, tag = 'input window, operand 1, single buffered']
    #allocation6 [shape = 's32[1]{0}', space=sflag, size = 0x4, scoped, tag = 'scoped memory for tpu_custom_call.1']
    #allocation7 [shape = 'u8[32768]{0}', space=vmem, size = 0x8000, scoped, tag = 'input window, operand 2, single buffered']
    #allocation8 [shape = 'u8[32768]{0}', space=vmem, size = 0x8000, scoped, tag = 'input window, operand 3, single buffered']
    #allocation9 [shape = 's32[1]{0}', space=sflag, size = 0x4, scoped, tag = 'scoped memory for tpu_custom_call.1']
    #allocation10 [shape = 'u8[8192]{0}', space=vmem, size = 0x2000, scoped, tag = 'output window, operand 0, single buffered']
    %10 = vsyncpa [#allocation3], 0
    %11 = vsyncpa [#allocation6], 0
    %12 = vsyncpa [#allocation9], 0
    %13 = vsyncpa [#allocation4], 0
    // Predicated region
    $region2: #{tpu_custom_call.1} parent=1 // pred_check
      _
    $region3: #{tpu_custom_call.1} parent=1 // pred_check_branch
      %15 = sbr.rel (0) target = $region5
    $region4: #{tpu_custom_call.1} parent=1 // pred_region
      %s17 = ssub.s32 128, 128
      %18 = vsyncadd [#allocation3], %s17
      %s19 = sshll.u32 [#allocation2], 4
      %s20 = int_to_ptr.vmem [resolvable:$true] %s19
      %25 = dma.hbm_to_vmem [thread:$0]  %s0, 128, %s20, [#allocation3], 64, 64, 4
    $region5: #{tpu_custom_call.1} parent=1 // pred_fallthru
      _
    // Predicated region
    $region6: #{tpu_custom_call.1} parent=1 // pred_check
      _
    $region7: #{tpu_custom_call.1} parent=1 // pred_check_branch
      %27 = sbr.rel (0) target = $region9
    $region8: #{tpu_custom_call.1} parent=1 // pred_region
      %s29 = ssub.s32 256, 256
      %30 = vsyncadd [#allocation6], %s29
      %s31 = sshll.u32 [#allocation5], 4
      %s32 = int_to_ptr.vmem [resolvable:$true] %s31
      %37 = dma.hbm_to_vmem [thread:$0]  %s1, 256, %s32, [#allocation6], 64, 64, 4
    $region9: #{tpu_custom_call.1} parent=1 // pred_fallthru
      _
    // Predicated region
    $region10: #{tpu_custom_call.1} parent=1 // pred_check
      _
    $region11: #{tpu_custom_call.1} parent=1 // pred_check_branch
      %39 = sbr.rel (0) target = $region13
    $region12: #{tpu_custom_call.1} parent=1 // pred_region
      %s41 = ssub.s32 1024, 1024
      %42 = vsyncadd [#allocation6], %s41
      %s43 = sshll.u32 [#allocation7], 4
      %s44 = int_to_ptr.vmem [resolvable:$true] %s43
      %49 = dma.hbm_to_vmem [thread:$0]  %s2, 1024, %s44, [#allocation6], 64, 64, 4
    $region13: #{tpu_custom_call.1} parent=1 // pred_fallthru
      _
    // Predicated region
    $region14: #{tpu_custom_call.1} parent=1 // pred_check
      _
    $region15: #{tpu_custom_call.1} parent=1 // pred_check_branch
      %51 = sbr.rel (0) target = $region17
    $region16: #{tpu_custom_call.1} parent=1 // pred_region
      %s53 = ssub.s32 1024, 1024
      %54 = vsyncadd [#allocation9], %s53
      %s55 = sshll.u32 [#allocation8], 4
      %s56 = int_to_ptr.vmem [resolvable:$true] %s55
      %61 = dma.hbm_to_vmem [thread:$0]  %s3, 1024, %s56, [#allocation9], 64, 64, 4
    $region17: #{tpu_custom_call.1} parent=1 // pred_fallthru
      _
    // Predicated region
    $region18: #{tpu_custom_call.1} parent=1 // pred_check
      _
    $region19: #{tpu_custom_call.1} parent=1 // pred_check_branch
      %63 = sbr.rel (0) target = $region21
    $region20: #{tpu_custom_call.1} parent=1 // pred_region
      _
    $region21: #{tpu_custom_call.1} parent=1 // pred_fallthru
      _
    // Predicated region
    $region22: #{tpu_custom_call.1} parent=1 // pred_check
      _
    $region23: #{tpu_custom_call.1} parent=1 // pred_check_branch
      %65 = sbr.rel (0) target = $region25
    $region24: #{tpu_custom_call.1} parent=1 // pred_region
      %66 = dma.done [#allocation3], 128
    $region25: #{tpu_custom_call.1} parent=1 // pred_fallthru
      _
    // Predicated region
    $region26: #{tpu_custom_call.1} parent=1 // pred_check
      _
    $region27: #{tpu_custom_call.1} parent=1 // pred_check_branch
      %68 = sbr.rel (0) target = $region29
    $region28: #{tpu_custom_call.1} parent=1 // pred_region
      %69 = dma.done [#allocation6], 256
    $region29: #{tpu_custom_call.1} parent=1 // pred_fallthru
      _
    // Predicated region
    $region30: #{tpu_custom_call.1} parent=1 // pred_check
      _
    $region31: #{tpu_custom_call.1} parent=1 // pred_check_branch
      %71 = sbr.rel (0) target = $region33
    $region32: #{tpu_custom_call.1} parent=1 // pred_region
      %72 = dma.done [#allocation6], 1024
    $region33: #{tpu_custom_call.1} parent=1 // pred_fallthru
      _
    // Predicated region
    $region34: #{tpu_custom_call.1} parent=1 // pred_check
      _
    $region35: #{tpu_custom_call.1} parent=1 // pred_check_branch
      %74 = sbr.rel (0) target = $region37
    $region36: #{tpu_custom_call.1} parent=1 // pred_region
      %75 = dma.done [#allocation9], 1024
    $region37: #{tpu_custom_call.1} parent=1 // pred_fallthru
      _
    %v77 = vld [vmem:[%s4] sm:$0xff]
    %v78 = vld [vmem:[#allocation2] sm:$0xf]
    %v79 = vld [vmem:[#allocation2 + $0x4] sm:$0xf]
    %v80 = vld [vmem:[#allocation5] sm:$0xf]
    %v81 = vld [vmem:[#allocation5 + $0x4] sm:$0xf]
    %v82 = vld [vmem:[#allocation5 + $0x8] sm:$0xf]
    %v83 = vld [vmem:[#allocation5 + $0xc] sm:$0xf]
    %v86 = vunpack.c.l.b16 %v78
    %v87 = vunpack.c.l.b16 %v79
    %v88 = vpack.c.b16 %v87, %v86
    %v93 = vunpack.c.l.b16 %v80
    %v94 = vunpack.c.l.b16 %v81
    %v95 = vunpack.c.l.b16 %v82
    %v96 = vunpack.c.l.b16 %v83
    %v97 = vpack.c.b16 %v94, %v93
    %v98 = vpack.c.b16 %v96, %v95
    %vm101 = vcmask 261120
    %v103 = vsel %vm101, %v88, 0
    %105 = vmatprep.subr.bf16.mxu0 0
    %106 = vmatpush1.bf16.msra.mxu0 %v97
    %107 = vmatprep.subr.bf16.mxu0 0
    %108 = vmatpush1.bf16.msra.mxu0 %v98
    %109 = vmatprep.subr.bf16.mxu0 0
    %110 = vmatpush1.bf16.msra.mxu0 0
    %111 = vmatprep.subr.bf16.mxu0 0
    %112 = vmatpush1.bf16.msra.mxu0 0
    %113 = vmatprep.subr.bf16.mxu0 0
    %114 = vmatpush1.bf16.msra.mxu0 0
    %115 = vmatprep.subr.bf16.mxu0 0
    %116 = vmatpush1.bf16.msra.mxu0 0
    %117 = vmatprep.subr.bf16.mxu0 0
    %118 = vmatpush1.bf16.msra.mxu0 0
    %119 = vmatprep.subr.bf16.mxu0 0
    %120 = vmatpush1.bf16.msra.mxu0 0
    %121 = vmatprep.subr.bf16.mxu0 0
    %122 = vmatpush1.bf16.msra.mxu0 0
    %123 = vmatprep.subr.bf16.mxu0 0
    %124 = vmatpush1.bf16.msra.mxu0 0
    %125 = vmatprep.subr.bf16.mxu0 0
    %126 = vmatpush1.bf16.msra.mxu0 0
    %127 = vmatprep.subr.bf16.mxu0 0
    %128 = vmatpush1.bf16.msra.mxu0 0
    %129 = vmatprep.subr.bf16.mxu0 0
    %130 = vmatpush1.bf16.msra.mxu0 0
    %131 = vmatprep.subr.bf16.mxu0 0
    %132 = vmatpush1.bf16.msra.mxu0 0
    %133 = vmatprep.subr.bf16.mxu0 0
    %134 = vmatpush1.bf16.msra.mxu0 0
    %135 = vmatprep.subr.bf16.mxu0 0
    %136 = vmatpush1.bf16.msra.mxu0 0
    %137 = vmatprep.mubr.bf16.mxu0 0
    %138 = vmatmul.mubr.bf16.gmra.mrb[0].mxu0 %v103
    %v139 = vpop.f32.mrb[0].mxu0
    %v140 = vadd.f32 0.0, %v139
    %v141 = vpop.f32.mrb[0].mxu0
    %v142 = vpop.f32.mrb[0].mxu0
    %v143 = vadd.f32 0.0, %v142
    %v144 = vpop.f32.mrb[0].mxu0
    %145 = vdwg.mxu0
    %v146 = vadd.f32 %v140, %v143
    %v147 = vrot.slane %v146, 4
    %v148 = vadd.f32 %v146, %v147
    %v149 = vrot.slane %v148, 2
    %v150 = vadd.f32 %v148, %v149
    %v151 = vrot.slane %v150, 1
    %v152 = vadd.f32 %v150, %v151
    %v153 = vmul.f32 %v140, %v140
    %v154 = vmul.f32 %v143, %v143
    %v155 = vadd.f32 %v153, %v154
    %v156 = vrot.slane %v155, 4
    %v157 = vadd.f32 %v155, %v156
    %v158 = vrot.slane %v157, 2
    %v159 = vadd.f32 %v157, %v158
    %v160 = vrot.slane %v159, 1
    %v161 = vadd.f32 %v159, %v160
    %v162 = vmul.f32 %v152, 0.0625
    %v163 = vmul.f32 %v161, 0.0625
    %v164 = vmul.f32 %v162, %v162
    %v165 = vsub.f32 %v163, %v164
    %v166 = vmax.f32 %v165, 0.0
    %v167 = vadd.f32 %v166, 1e-05
    %v168 = vrsqrt.pop %v167
    %v169 = vmul.f32 %v77, %v168
    %v170 = vmul.f32 %v162, %v169
    %v172 = vrot.slane %v170, 7
    %v174 = vsub.f32 %v77, %v172
    %v175 = vlaneseq
    %v176 = vshrl.u32 %v175, 7
    %v177 = vsub.s32 0, %v176
    %v178 = vrot.slane %v169, %v177
    %v179 = vmul.f32 %v140, %v178
    %v180 = vmul.f32 %v143, %v178
    %v181 = vlaneseq
    %v182 = vshrl.u32 %v181, 7
    %v183 = vsub.s32 1, %v182
    %v184 = vrot.slane %v174, %v183
    %v185 = vadd.f32 %v179, %v184
    %v186 = vadd.f32 %v180, %v184
    %vm187 = vcmp.ge.f32.partialorder %v185, 0.0
    %vm188 = vcmp.ge.f32.partialorder %v186, 0.0
    %v190 = vrot.slane %v77, 5
    %s191 = vtos %v190
    %v192 = vstv %s191
    %v194 = vmul.f32 %v192, %v185
    %v195 = vmul.f32 %v192, %v186
    %v196 = vsel %vm187, %v185, %v194
    %v197 = vsel %vm188, %v186, %v195
    %v198 = vpack.c.bf16 %v197, %v196
    %v199 = vld [vmem:[#allocation7] sm:$0xf]
    %v200 = vld [vmem:[#allocation7 + $0x4] sm:$0xf]
    %v201 = vld [vmem:[#allocation7 + $0x8] sm:$0xf]
    %v202 = vld [vmem:[#allocation7 + $0xc] sm:$0xf]
    %v203 = vld [vmem:[#allocation7 + $0x10] sm:$0xf]
    %v204 = vld [vmem:[#allocation7 + $0x14] sm:$0xf]
    %v205 = vld [vmem:[#allocation7 + $0x18] sm:$0xf]
    %v206 = vld [vmem:[#allocation7 + $0x1c] sm:$0xf]
    %v207 = vld [vmem:[#allocation7 + $0x20] sm:$0xf]
    %v208 = vld [vmem:[#allocation7 + $0x24] sm:$0xf]
    %v209 = vld [vmem:[#allocation7 + $0x28] sm:$0xf]
    %v210 = vld [vmem:[#allocation7 + $0x2c] sm:$0xf]
    %v211 = vld [vmem:[#allocation7 + $0x30] sm:$0xf]
    %v212 = vld [vmem:[#allocation7 + $0x34] sm:$0xf]
    %v213 = vld [vmem:[#allocation7 + $0x38] sm:$0xf]
    %v214 = vld [vmem:[#allocation7 + $0x3c] sm:$0xf]
    %v231 = vunpack.c.l.b16 %v199
    %v232 = vunpack.c.l.b16 %v200
    %v233 = vunpack.c.l.b16 %v201
    %v234 = vunpack.c.l.b16 %v202
    %v235 = vunpack.c.l.b16 %v203
    %v236 = vunpack.c.l.b16 %v204
    %v237 = vunpack.c.l.b16 %v205
    %v238 = vunpack.c.l.b16 %v206
    %v239 = vunpack.c.l.b16 %v207
    %v240 = vunpack.c.l.b16 %v208
    %v241 = vunpack.c.l.b16 %v209
    %v242 = vunpack.c.l.b16 %v210
    %v243 = vunpack.c.l.b16 %v211
    %v244 = vunpack.c.l.b16 %v212
    %v245 = vunpack.c.l.b16 %v213
    %v246 = vunpack.c.l.b16 %v214
    %v247 = vpack.c.b16 %v232, %v231
    %v248 = vpack.c.b16 %v234, %v233
    %v249 = vpack.c.b16 %v236, %v235
    %v250 = vpack.c.b16 %v238, %v237
    %v251 = vpack.c.b16 %v240, %v239
    %v252 = vpack.c.b16 %v242, %v241
    %v253 = vpack.c.b16 %v244, %v243
    %v254 = vpack.c.b16 %v246, %v245
    %263 = vmatprep.subr.bf16.mxu0 0
    %264 = vmatpush1.bf16.msra.mxu0 %v247
    %265 = vmatprep.subr.bf16.mxu0 0
    %266 = vmatpush1.bf16.msra.mxu0 %v248
    %267 = vmatprep.subr.bf16.mxu0 0
    %268 = vmatpush1.bf16.msra.mxu0 %v249
    %269 = vmatprep.subr.bf16.mxu0 0
    %270 = vmatpush1.bf16.msra.mxu0 %v250
    %271 = vmatprep.subr.bf16.mxu0 0
    %272 = vmatpush1.bf16.msra.mxu0 %v251
    %273 = vmatprep.subr.bf16.mxu0 0
    %274 = vmatpush1.bf16.msra.mxu0 %v252
    %275 = vmatprep.subr.bf16.mxu0 0
    %276 = vmatpush1.bf16.msra.mxu0 %v253
    %277 = vmatprep.subr.bf16.mxu0 0
    %278 = vmatpush1.bf16.msra.mxu0 %v254
    %279 = vmatprep.subr.bf16.mxu0 0
    %280 = vmatpush1.bf16.msra.mxu0 0
    %281 = vmatprep.subr.bf16.mxu0 0
    %282 = vmatpush1.bf16.msra.mxu0 0
    %283 = vmatprep.subr.bf16.mxu0 0
    %284 = vmatpush1.bf16.msra.mxu0 0
    %285 = vmatprep.subr.bf16.mxu0 0
    %286 = vmatpush1.bf16.msra.mxu0 0
    %287 = vmatprep.subr.bf16.mxu0 0
    %288 = vmatpush1.bf16.msra.mxu0 0
    %289 = vmatprep.subr.bf16.mxu0 0
    %290 = vmatpush1.bf16.msra.mxu0 0
    %291 = vmatprep.subr.bf16.mxu0 0
    %292 = vmatpush1.bf16.msra.mxu0 0
    %293 = vmatprep.subr.bf16.mxu0 0
    %294 = vmatpush1.bf16.msra.mxu0 0
    %295 = vmatprep.mubr.bf16.mxu0 0
    %296 = vmatmul.mubr.bf16.gmra.mrb[0].mxu0 %v198
    %v297 = vpop.f32.mrb[0].mxu0
    %v298 = vadd.f32 0.0, %v297
    %v299 = vpop.f32.mrb[0].mxu0
    %v300 = vpop.f32.mrb[0].mxu0
    %v301 = vadd.f32 0.0, %v300
    %v302 = vpop.f32.mrb[0].mxu0
    %303 = vdwg.mxu0
    %v304 = vadd.f32 %v298, %v301
    %v305 = vrot.slane %v304, 4
    %v306 = vadd.f32 %v304, %v305
    %v307 = vrot.slane %v306, 2
    %v308 = vadd.f32 %v306, %v307
    %v309 = vrot.slane %v308, 1
    %v310 = vadd.f32 %v308, %v309
    %v311 = vmul.f32 %v298, %v298
    %v312 = vmul.f32 %v301, %v301
    %v313 = vadd.f32 %v311, %v312
    %v314 = vrot.slane %v313, 4
    %v315 = vadd.f32 %v313, %v314
    %v316 = vrot.slane %v315, 2
    %v317 = vadd.f32 %v315, %v316
    %v318 = vrot.slane %v317, 1
    %v319 = vadd.f32 %v317, %v318
    %v320 = vmul.f32 %v310, 0.0625
    %v321 = vmul.f32 %v319, 0.0625
    %v322 = vmul.f32 %v320, %v320
    %v323 = vsub.f32 %v321, %v322
    %v324 = vmax.f32 %v323, 0.0
    %v325 = vadd.f32 %v324, 1e-05
    %v326 = vrsqrt.pop %v325
    %v327 = vmul.f32 %v77, %v326
    %v328 = vmul.f32 %v320, %v327
    %v330 = vrot.slane %v328, 7
    %v332 = vsub.f32 %v77, %v330
    %v333 = vlaneseq
    %v334 = vshrl.u32 %v333, 7
    %v335 = vsub.s32 2, %v334
    %v336 = vrot.slane %v327, %v335
    %v337 = vmul.f32 %v298, %v336
    %v338 = vmul.f32 %v301, %v336
    %v339 = vlaneseq
    %v340 = vshrl.u32 %v339, 7
    %v341 = vsub.s32 3, %v340
    %v342 = vrot.slane %v332, %v341
    %v343 = vadd.f32 %v337, %v342
    %v344 = vadd.f32 %v338, %v342
    %vm345 = vcmp.ge.f32.partialorder %v343, 0.0
    %vm346 = vcmp.ge.f32.partialorder %v344, 0.0
    %v347 = vmul.f32 %v192, %v343
    %v348 = vmul.f32 %v192, %v344
    %v349 = vsel %vm345, %v343, %v347
    %v350 = vsel %vm346, %v344, %v348
    %v351 = vpack.c.bf16 %v350, %v349
    %v352 = vld [vmem:[#allocation8] sm:$0xf]
    %v353 = vld [vmem:[#allocation8 + $0x4] sm:$0xf]
    %v354 = vld [vmem:[#allocation8 + $0x8] sm:$0xf]
    %v355 = vld [vmem:[#allocation8 + $0xc] sm:$0xf]
    %v356 = vld [vmem:[#allocation8 + $0x10] sm:$0xf]
    %v357 = vld [vmem:[#allocation8 + $0x14] sm:$0xf]
    %v358 = vld [vmem:[#allocation8 + $0x18] sm:$0xf]
    %v359 = vld [vmem:[#allocation8 + $0x1c] sm:$0xf]
    %v360 = vld [vmem:[#allocation8 + $0x20] sm:$0xf]
    %v361 = vld [vmem:[#allocation8 + $0x24] sm:$0xf]
    %v362 = vld [vmem:[#allocation8 + $0x28] sm:$0xf]
    %v363 = vld [vmem:[#allocation8 + $0x2c] sm:$0xf]
    %v364 = vld [vmem:[#allocation8 + $0x30] sm:$0xf]
    %v365 = vld [vmem:[#allocation8 + $0x34] sm:$0xf]
    %v366 = vld [vmem:[#allocation8 + $0x38] sm:$0xf]
    %v367 = vld [vmem:[#allocation8 + $0x3c] sm:$0xf]
    %v368 = vlaneseq
    %v369 = vshrl.u32 %v368, 7
    %v370 = vsub.s32 4, %v369
    %v371 = vrot.slane %v77, %v370
    %v388 = vunpack.c.l.b16 %v352
    %v389 = vunpack.c.l.b16 %v353
    %v390 = vunpack.c.l.b16 %v354
    %v391 = vunpack.c.l.b16 %v355
    %v392 = vunpack.c.l.b16 %v356
    %v393 = vunpack.c.l.b16 %v357
    %v394 = vunpack.c.l.b16 %v358
    %v395 = vunpack.c.l.b16 %v359
    %v396 = vunpack.c.l.b16 %v360
    %v397 = vunpack.c.l.b16 %v361
    %v398 = vunpack.c.l.b16 %v362
    %v399 = vunpack.c.l.b16 %v363
    %v400 = vunpack.c.l.b16 %v364
    %v401 = vunpack.c.l.b16 %v365
    %v402 = vunpack.c.l.b16 %v366
    %v403 = vunpack.c.l.b16 %v367
    %v404 = vpack.c.b16 %v389, %v388
    %v405 = vpack.c.b16 %v391, %v390
    %v406 = vpack.c.b16 %v393, %v392
    %v407 = vpack.c.b16 %v395, %v394
    %v408 = vpack.c.b16 %v397, %v396
    %v409 = vpack.c.b16 %v399, %v398
    %v410 = vpack.c.b16 %v401, %v400
    %v411 = vpack.c.b16 %v403, %v402
    %420 = vmatprep.subr.bf16.mxu0 0
    %421 = vmatpush1.bf16.msra.mxu0 %v404
    %422 = vmatprep.subr.bf16.mxu0 0
    %423 = vmatpush1.bf16.msra.mxu0 %v405
    %424 = vmatprep.subr.bf16.mxu0 0
    %425 = vmatpush1.bf16.msra.mxu0 %v406
    %426 = vmatprep.subr.bf16.mxu0 0
    %427 = vmatpush1.bf16.msra.mxu0 %v407
    %428 = vmatprep.subr.bf16.mxu0 0
    %429 = vmatpush1.bf16.msra.mxu0 %v408
    %430 = vmatprep.subr.bf16.mxu0 0
    %431 = vmatpush1.bf16.msra.mxu0 %v409
    %432 = vmatprep.subr.bf16.mxu0 0
    %433 = vmatpush1.bf16.msra.mxu0 %v410
    %434 = vmatprep.subr.bf16.mxu0 0
    %435 = vmatpush1.bf16.msra.mxu0 %v411
    %436 = vmatprep.subr.bf16.mxu0 0
    %437 = vmatpush1.bf16.msra.mxu0 0
    %438 = vmatprep.subr.bf16.mxu0 0
    %439 = vmatpush1.bf16.msra.mxu0 0
    %440 = vmatprep.subr.bf16.mxu0 0
    %441 = vmatpush1.bf16.msra.mxu0 0
    %442 = vmatprep.subr.bf16.mxu0 0
    %443 = vmatpush1.bf16.msra.mxu0 0
    %444 = vmatprep.subr.bf16.mxu0 0
    %445 = vmatpush1.bf16.msra.mxu0 0
    %446 = vmatprep.subr.bf16.mxu0 0
    %447 = vmatpush1.bf16.msra.mxu0 0
    %448 = vmatprep.subr.bf16.mxu0 0
    %449 = vmatpush1.bf16.msra.mxu0 0
    %450 = vmatprep.subr.bf16.mxu0 0
    %451 = vmatpush1.bf16.msra.mxu0 0
    %452 = vmatprep.mubr.bf16.mxu0 0
    %453 = vmatmul.mubr.bf16.gmra.mrb[0].mxu0 %v351
    %v454 = vpop.f32.mrb[0].mxu0
    %v455 = vadd.f32 %v371, %v454
    %v456 = vpop.f32.mrb[0].mxu0
    %v457 = vpop.f32.mrb[0].mxu0
    %v458 = vadd.f32 %v371, %v457
    %v459 = vpop.f32.mrb[0].mxu0
    %460 = vdwg.mxu0
    %461 = vst [vmem:[#allocation10] sm:$0xff] %v455
    %462 = vst [vmem:[#allocation10 + $0x8] sm:$0xff] %v458
    // Predicated region
    $region38: #{tpu_custom_call.1} parent=1 // pred_check
      _
    $region39: #{tpu_custom_call.1} parent=1 // pred_check_branch
      %464 = sbr.rel (0) target = $region41
    $region40: #{tpu_custom_call.1} parent=1 // pred_region
      %s466 = ssub.s32 256, 256
      %467 = vsyncadd [#allocation4], %s466
      %s468 = sshll.u32 [#allocation10], 4
      %s469 = int_to_ptr.vmem [resolvable:$true] %s468
      %474 = dma.vmem_to_hbm [thread:$0]  %s469, 256, %s5, [#allocation4], 128, 128, 8
    $region41: #{tpu_custom_call.1} parent=1 // pred_fallthru
      _
    // Predicated region
    $region42: #{tpu_custom_call.1} parent=1 // pred_check
      _
    $region43: #{tpu_custom_call.1} parent=1 // pred_check_branch
      %476 = sbr.rel (0) target = $region45
    $region44: #{tpu_custom_call.1} parent=1 // pred_region
      %477 = dma.done [#allocation4], 256
    $region45: #{tpu_custom_call.1} parent=1 // pred_fallthru
      _
    %478 = vsyncpa [#allocation3], 1
    %479 = vsyncpa [#allocation6], 1
    %480 = vsyncpa [#allocation9], 1
    %481 = vsyncpa [#allocation4], 1

</llo_original>
